<compile_context>
chip_gen: v7x
topology: tpu7x:2x2x1
jax: 0.10.0
libtpu: 0.0.40
codegen_flags: <defaults>
</compile_context>

<pallas_src>
import functools

import jax
import jax.numpy as jnp
from jax.experimental import pallas as pl
from jax.experimental.pallas import tpu as pltpu


def _round_up8(n):
    return -(-n // 8) * 8


def attention_features_kernel(c_ref, h_ref, pk_ref, o_ref, *,
                              w1, w2, e, k1, k2, bpad,
                              b1_row, w2_row, b2_row, alpha_row):
    # c_ref : (S*Bp, E)  rows ordered (s, b): row = s*Bp + b
    # h_ref : (Bp, K2)   hidden state h_{t-1} (padded batch rows are zero)
    # pk_ref: packed constants, rows:
    #         [0 : w1*E)                     conv1 weight, im2col (W1*E, K1)
    #         [b1_row]                       conv1 bias   (1, K1)
    #         [w2_row : w2_row + w2*K1)      conv2 weight, im2col (W2*K1, K2)
    #         [b2_row]                       conv2 bias   (1, K2)
    #         [alpha_row]                    PReLU alpha replicated across lanes
    # o_ref : (L2*Bp, K2)
    x = c_ref[...]
    SB = x.shape[0]
    L1B = SB - (w1 - 1) * bpad           # L1 * Bp
    L2B = L1B - (w2 - 1) * bpad          # L2 * Bp

    # ---- conv1: W1 accumulating matmuls over the taps (no lane concat) ----
    # A length shift of j is a row shift of j*Bp (sublane-aligned), and the
    # weight row-slices start at multiples of 8 -> all slices are free views.
    l1 = jnp.dot(x[0:L1B, :], pk_ref[0:e, 0:k1],
                 preferred_element_type=jnp.float32)
    for j in range(1, w1):
        l1 = l1 + jnp.dot(x[j * bpad:j * bpad + L1B, :],
                          pk_ref[j * e:(j + 1) * e, 0:k1],
                          preferred_element_type=jnp.float32)
    l1 = l1 + pk_ref[b1_row:b1_row + 1, 0:k1]            # bias (1, K1)

    # PReLU (single shared alpha, stored lane-replicated in the packed ref).
    # TODO(synk): dropout is implemented as eval-mode identity (no RNG mask).
    alpha = pk_ref[alpha_row:alpha_row + 1, 0:k1]         # (1, K1), all equal
    l1 = jnp.where(l1 > 0, l1, l1 * alpha)

    # ---- conv2: same accumulating-tap scheme ----
    l2 = jnp.dot(l1[0:L2B, :], pk_ref[w2_row:w2_row + k1, 0:k2],
                 preferred_element_type=jnp.float32)
    for j in range(1, w2):
        l2 = l2 + jnp.dot(l1[j * bpad:j * bpad + L2B, :],
                          pk_ref[w2_row + j * k1:w2_row + (j + 1) * k1, 0:k2],
                          preferred_element_type=jnp.float32)
    l2 = l2 + pk_ref[b2_row:b2_row + 1, 0:k2]             # bias (1, K2)

    # ---- gate by h_{t-1}: broadcast the (Bp, K2) tile over output length ----
    l2n = L2B // bpad
    hb = jnp.tile(h_ref[...], (l2n, 1))                   # (L2*Bp, K2)
    l2 = l2 * hb

    # ---- F.normalize(p=2, dim=channel), eps=1e-12 ----
    # rsqrt(max(sumsq, 1e-24)) == 1 / max(||l2||_2, 1e-12); padded batch rows
    # are exactly zero (h=0), so they stay zero here (no NaN).
    sumsq = jnp.sum(l2 * l2, axis=-1, keepdims=True)
    inv = jax.lax.rsqrt(jnp.maximum(sumsq, 1e-24))
    o_ref[...] = l2 * inv


def attention_features(C, h_t, params, *, w1, w2):
    """C: (S, B, E), h_t: (1, B, K2). Returns (B, K2, L_out) like the PyTorch module."""
    S, B, E = C.shape
    K1 = params["conv1_w"].shape[0]
    K2 = params["conv2_w"].shape[0]
    L1 = S - w1 + 1
    L2 = L1 - w2 + 1

    # Pad batch to a multiple of 8 so every in-kernel row shift / slice length
    # is sublane-aligned (free views instead of sublane-rotate copies).
    Bp = _round_up8(max(B, 8))

    Cp = jnp.zeros((S, Bp, E), jnp.float32).at[:, :B, :].set(C.astype(jnp.float32))
    c2 = Cp.reshape(S * Bp, E)                                   # free view
    hp = jnp.zeros((Bp, K2), jnp.float32).at[:B, :].set(
        h_t.reshape(B, K2).astype(jnp.float32))

    # ---- pack all constant operands into one small array (one DMA) ----
    PC = max(K1, K2)
    w1_rows = w1 * E
    b1_row = _round_up8(w1_rows)
    w2_row = b1_row + 8
    b2_row = w2_row + _round_up8(w2 * K1)
    alpha_row = b2_row + 8
    total_rows = alpha_row + 8

    # conv weights: PyTorch (C_out, C_in, W) -> im2col packing (W*C_in, C_out)
    w1k = jnp.transpose(params["conv1_w"], (2, 1, 0)).reshape(w1 * E, K1)
    w2k = jnp.transpose(params["conv2_w"], (2, 1, 0)).reshape(w2 * K1, K2)

    packed = jnp.zeros((total_rows, PC), jnp.float32)
    packed = packed.at[:w1_rows, :K1].set(w1k.astype(jnp.float32))
    packed = packed.at[b1_row, :K1].set(params["conv1_b"].astype(jnp.float32))
    packed = packed.at[w2_row:w2_row + w2 * K1, :K2].set(w2k.astype(jnp.float32))
    packed = packed.at[b2_row, :K2].set(params["conv2_b"].astype(jnp.float32))
    packed = packed.at[alpha_row, :].set(
        params["prelu_alpha"].astype(jnp.float32).reshape(())[None])

    kernel = functools.partial(
        attention_features_kernel, w1=w1, w2=w2, e=E, k1=K1, k2=K2, bpad=Bp,
        b1_row=b1_row, w2_row=w2_row, b2_row=b2_row, alpha_row=alpha_row)

    vmem = pl.BlockSpec(memory_space=pltpu.MemorySpace.VMEM)
    out = pl.pallas_call(
        kernel,
        out_shape=jax.ShapeDtypeStruct((L2 * Bp, K2), jnp.float32),
        in_specs=[vmem, vmem, vmem],
        out_specs=vmem,
    )(c2, hp, packed)

    # rows are (l, b): un-flatten (free), drop batch padding, present
    # PyTorch's (B, K2, L_out) layout.  Tiny output; only wrapper layout op.
    return jnp.transpose(out.reshape(L2, Bp, K2)[:, :B, :], (1, 2, 0))


def reference(C, h_t, params, w1, w2):
    """Pure-JAX replica of the PyTorch forward (eval mode) for validation."""
    c = jnp.transpose(C, (1, 2, 0))    # (B, E, S)
    h = jnp.transpose(h_t, (1, 2, 0))  # (B, K2, 1)
    S = c.shape[2]
    L1 = S - w1 + 1
    x1 = jnp.stack([c[:, :, j:j + L1] for j in range(w1)], axis=-1)   # (B, E, L1, W1)
    l1 = jnp.einsum("belw,kew->bkl", x1, params["conv1_w"]) \
        + params["conv1_b"][None, :, None]
    alpha = params["prelu_alpha"][0]
    l1 = jnp.where(l1 > 0, l1, alpha * l1)
    L2_ = L1 - w2 + 1
    x2 = jnp.stack([l1[:, :, j:j + L2_] for j in range(w2)], axis=-1)  # (B, K1, L2, W2)
    l2 = jnp.einsum("bklw,okw->bol", x2, params["conv2_w"]) \
        + params["conv2_b"][None, :, None]
    l2 = l2 * h
    norm = jnp.sqrt(jnp.sum(l2 * l2, axis=1, keepdims=True))
    return l2 / jnp.maximum(norm, 1e-12)


if __name__ == "__main__":
    # Small, module-consistent sizes.
    embedding_dim, k1, w1, k2, w2 = 32, 16, 3, 16, 3
    seq_len, batch = 16, 2

    key = jax.random.PRNGKey(0)
    ks = jax.random.split(key, 6)

    # Deterministic, PyTorch-style uniform(-1/sqrt(fan_in), +) init.
    s1 = 1.0 / jnp.sqrt(embedding_dim * w1)
    s2 = 1.0 / jnp.sqrt(k1 * w2)
    params = {
        "conv1_w": jax.random.uniform(ks[0], (k1, embedding_dim, w1),
                                      minval=-s1, maxval=s1, dtype=jnp.float32),
        "conv1_b": jax.random.uniform(ks[1], (k1,), minval=-s1, maxval=s1,
                                      dtype=jnp.float32),
        "conv2_w": jax.random.uniform(ks[2], (k2, k1, w2),
                                      minval=-s2, maxval=s2, dtype=jnp.float32),
        "conv2_b": jax.random.uniform(ks[3], (k2,), minval=-s2, maxval=s2,
                                      dtype=jnp.float32),
        "prelu_alpha": jnp.array([0.25], dtype=jnp.float32),  # nn.PReLU() default
    }

    C = jax.random.normal(ks[4], (seq_len, batch, embedding_dim), dtype=jnp.float32)
    h_t = jax.random.normal(ks[5], (1, batch, k2), dtype=jnp.float32)

    out = attention_features(C, h_t, params, w1=w1, w2=w2)
    out = jax.block_until_ready(out)

    ref = reference(C, h_t, params, w1, w2)
    assert out.shape == ref.shape, (out.shape, ref.shape)
    assert jnp.allclose(out, ref, atol=1e-5, rtol=1e-5), \
        float(jnp.max(jnp.abs(out - ref)))

    print("KERNEL_OK")
</pallas_src>

<mosaic_0001>
module attributes {stable_mosaic.version = 11 : i64} {
  func.func @attention_features_kernel(%arg0: memref<128x32xf32, #tpu.memory_space<vmem>>, %arg1: memref<8x16xf32, #tpu.memory_space<vmem>>, %arg2: memref<168x16xf32, #tpu.memory_space<vmem>>, %arg3: memref<96x16xf32, #tpu.memory_space<vmem>>) attributes {dimension_semantics = [], scalar_prefetch = 0 : i64, scratch_operands = 0 : i64, tpu.core_type = #tpu.core_type<tc>} {
    %c0 = arith.constant 0 : index
    %c0_0 = arith.constant 0 : index
    %0 = vector.load %arg0[%c0, %c0_0] : memref<128x32xf32, #tpu.memory_space<vmem>>, vector<128x32xf32>
    %1 = vector.extract_strided_slice %0 {offsets = [0, 0], sizes = [112, 32], strides = [1, 1]} : vector<128x32xf32> to vector<112x32xf32>
    %c0_1 = arith.constant 0 : index
    %c0_2 = arith.constant 0 : index
    %2 = vector.load %arg2[%c0_1, %c0_2] : memref<168x16xf32, #tpu.memory_space<vmem>>, vector<32x16xf32>
    %cst = arith.constant dense<0.000000e+00> : vector<112x16xf32>
    %3 = tpu.matmul %1, %2, %cst {dimension_numbers = #tpu.dot_dimension_numbers<[1], [0], [0], [1], [0, 0, 1, 1], [], []>} : vector<112x32xf32>, vector<32x16xf32>, vector<112x16xf32> -> vector<112x16xf32>
    %4 = vector.extract_strided_slice %0 {offsets = [8, 0], sizes = [112, 32], strides = [1, 1]} : vector<128x32xf32> to vector<112x32xf32>
    %c32 = arith.constant 32 : index
    %c0_3 = arith.constant 0 : index
    %5 = vector.load %arg2[%c32, %c0_3] : memref<168x16xf32, #tpu.memory_space<vmem>>, vector<32x16xf32>
    %cst_4 = arith.constant dense<0.000000e+00> : vector<112x16xf32>
    %6 = tpu.matmul %4, %5, %cst_4 {dimension_numbers = #tpu.dot_dimension_numbers<[1], [0], [0], [1], [0, 0, 1, 1], [], []>} : vector<112x32xf32>, vector<32x16xf32>, vector<112x16xf32> -> vector<112x16xf32>
    %7 = arith.addf %3, %6 : vector<112x16xf32>
    %8 = vector.extract_strided_slice %0 {offsets = [16, 0], sizes = [112, 32], strides = [1, 1]} : vector<128x32xf32> to vector<112x32xf32>
    %c64 = arith.constant 64 : index
    %c0_5 = arith.constant 0 : index
    %9 = vector.load %arg2[%c64, %c0_5] : memref<168x16xf32, #tpu.memory_space<vmem>>, vector<32x16xf32>
    %cst_6 = arith.constant dense<0.000000e+00> : vector<112x16xf32>
    %10 = tpu.matmul %8, %9, %cst_6 {dimension_numbers = #tpu.dot_dimension_numbers<[1], [0], [0], [1], [0, 0, 1, 1], [], []>} : vector<112x32xf32>, vector<32x16xf32>, vector<112x16xf32> -> vector<112x16xf32>
    %11 = arith.addf %7, %10 : vector<112x16xf32>
    %c96 = arith.constant 96 : index
    %c0_7 = arith.constant 0 : index
    %12 = vector.load %arg2[%c96, %c0_7] : memref<168x16xf32, #tpu.memory_space<vmem>>, vector<1x16xf32>
    %13 = vector.broadcast %12 : vector<1x16xf32> to vector<112x16xf32>
    %14 = arith.addf %11, %13 : vector<112x16xf32>
    %c160 = arith.constant 160 : index
    %c0_8 = arith.constant 0 : index
    %15 = vector.load %arg2[%c160, %c0_8] : memref<168x16xf32, #tpu.memory_space<vmem>>, vector<1x16xf32>
    %cst_9 = arith.constant 0.000000e+00 : f32
    %16 = vector.broadcast %cst_9 : f32 to vector<112x16xf32>
    %17 = arith.cmpf ogt, %14, %16 : vector<112x16xf32>
    %18 = vector.broadcast %15 : vector<1x16xf32> to vector<112x16xf32>
    %19 = arith.mulf %14, %18 : vector<112x16xf32>
    %20 = arith.select %17, %14, %19 : vector<112x16xi1>, vector<112x16xf32>
    %21 = vector.extract_strided_slice %20 {offsets = [0, 0], sizes = [96, 16], strides = [1, 1]} : vector<112x16xf32> to vector<96x16xf32>
    %c104 = arith.constant 104 : index
    %c0_10 = arith.constant 0 : index
    %22 = vector.load %arg2[%c104, %c0_10] : memref<168x16xf32, #tpu.memory_space<vmem>>, vector<16x16xf32>
    %cst_11 = arith.constant dense<0.000000e+00> : vector<96x16xf32>
    %23 = tpu.matmul %21, %22, %cst_11 {dimension_numbers = #tpu.dot_dimension_numbers<[1], [0], [0], [1], [0, 0, 1, 1], [], []>} : vector<96x16xf32>, vector<16x16xf32>, vector<96x16xf32> -> vector<96x16xf32>
    %24 = vector.extract_strided_slice %20 {offsets = [8, 0], sizes = [96, 16], strides = [1, 1]} : vector<112x16xf32> to vector<96x16xf32>
    %c120 = arith.constant 120 : index
    %c0_12 = arith.constant 0 : index
    %25 = vector.load %arg2[%c120, %c0_12] : memref<168x16xf32, #tpu.memory_space<vmem>>, vector<16x16xf32>
    %cst_13 = arith.constant dense<0.000000e+00> : vector<96x16xf32>
    %26 = tpu.matmul %24, %25, %cst_13 {dimension_numbers = #tpu.dot_dimension_numbers<[1], [0], [0], [1], [0, 0, 1, 1], [], []>} : vector<96x16xf32>, vector<16x16xf32>, vector<96x16xf32> -> vector<96x16xf32>
    %27 = arith.addf %23, %26 : vector<96x16xf32>
    %28 = vector.extract_strided_slice %20 {offsets = [16, 0], sizes = [96, 16], strides = [1, 1]} : vector<112x16xf32> to vector<96x16xf32>
    %c136 = arith.constant 136 : index
    %c0_14 = arith.constant 0 : index
    %29 = vector.load %arg2[%c136, %c0_14] : memref<168x16xf32, #tpu.memory_space<vmem>>, vector<16x16xf32>
    %cst_15 = arith.constant dense<0.000000e+00> : vector<96x16xf32>
    %30 = tpu.matmul %28, %29, %cst_15 {dimension_numbers = #tpu.dot_dimension_numbers<[1], [0], [0], [1], [0, 0, 1, 1], [], []>} : vector<96x16xf32>, vector<16x16xf32>, vector<96x16xf32> -> vector<96x16xf32>
    %31 = arith.addf %27, %30 : vector<96x16xf32>
    %c152 = arith.constant 152 : index
    %c0_16 = arith.constant 0 : index
    %32 = vector.load %arg2[%c152, %c0_16] : memref<168x16xf32, #tpu.memory_space<vmem>>, vector<1x16xf32>
    %33 = vector.broadcast %32 : vector<1x16xf32> to vector<96x16xf32>
    %34 = arith.addf %31, %33 : vector<96x16xf32>
    %c0_17 = arith.constant 0 : index
    %c0_18 = arith.constant 0 : index
    %35 = vector.load %arg1[%c0_17, %c0_18] : memref<8x16xf32, #tpu.memory_space<vmem>>, vector<8x16xf32>
    %36 = tpu.concatenate %35, %35, %35, %35, %35, %35, %35, %35, %35, %35, %35, %35 in 0 : vector<8x16xf32>, vector<8x16xf32>, vector<8x16xf32>, vector<8x16xf32>, vector<8x16xf32>, vector<8x16xf32>, vector<8x16xf32>, vector<8x16xf32>, vector<8x16xf32>, vector<8x16xf32>, vector<8x16xf32>, vector<8x16xf32> -> vector<96x16xf32>
    %37 = arith.mulf %34, %36 : vector<96x16xf32>
    %38 = arith.mulf %37, %37 : vector<96x16xf32>
    %cst_19 = arith.constant dense<0.000000e+00> : vector<96xf32>
    %39 = vector.multi_reduction <add>, %38, %cst_19 [1] : vector<96x16xf32> to vector<96xf32>
    %40 = vector.shape_cast %39 : vector<96xf32> to vector<96x1xf32>
    %cst_20 = arith.constant 1.000000e-24 : f32
    %41 = vector.broadcast %cst_20 : f32 to vector<96x1xf32>
    %42 = arith.maximumf %40, %41 : vector<96x1xf32>
    %43 = math.rsqrt %42 : vector<96x1xf32>
    %44 = vector.broadcast %43 : vector<96x1xf32> to vector<96x16xf32>
    %45 = arith.mulf %37, %44 : vector<96x16xf32>
    %c0_21 = arith.constant 0 : index
    %c0_22 = arith.constant 0 : index
    %46 = vector.load %arg3[%c0_21, %c0_22] : memref<96x16xf32, #tpu.memory_space<vmem>>, vector<96x16xf32>
    tpu.vector_store %arg3[%c0_21, %c0_22], %45 {strides = array<i32>} : memref<96x16xf32, #tpu.memory_space<vmem>>, vector<96x16xf32>,
    return
  }
}

</mosaic_0001>

<llo_original>
// kernel: tpu_custom_call.1
$region0: #{tpu_custom_call.1}
  #allocation0 [shape = 'u32[]', space=smem, size = 0x4, offset = 0x4, fixed_abs, tag = 'smem constant byte address 0x4 - core index']
  #allocation1 [shape = 'u32[144,128]{1,0:T(1,128)}', space=vmem, size = 0x12000, scoped, tag = 'internal scratch']
  %s0 = inlined_call_operand.vmem [shape: f32[128,32], index: 0, kind: input, shape index: {}]
  %s1 = inlined_call_operand.vmem [shape: f32[8,16], index: 1, kind: input, shape index: {}]
  %s2 = inlined_call_operand.vmem [shape: f32[168,16], index: 2, kind: input, shape index: {}]
  %s3 = inlined_call_operand.vmem [shape: f32[96,16], index: 3, kind: output, shape index: {}]
  %s4 = sld [smem:[#allocation0]]
  $region22: #{tpu_custom_call.1} parent=0
    _
  %s6 = ssub.s32 1, %s4
  %s7 = scalar_select 0, %s6, %s4
  // Predicated region
  $region2: #{tpu_custom_call.1} parent=0 // pred_check
    _
  $region3: #{tpu_custom_call.1} parent=0 // pred_check_branch
    %9 = sbr.rel (0) target = $region5
  $region4: #{tpu_custom_call.1} parent=0 // pred_region
    _
  $region5: #{tpu_custom_call.1} parent=0 // pred_fallthru
    _
  // Predicated region
  $region6: #{tpu_custom_call.1} parent=0 // pred_check
    _
  $region7: #{tpu_custom_call.1} parent=0 // pred_check_branch
    %11 = sbr.rel (0) target = $region9
  $region8: #{tpu_custom_call.1} parent=0 // pred_region
    _
  $region9: #{tpu_custom_call.1} parent=0 // pred_fallthru
    _
  // Predicated region
  $region10: #{tpu_custom_call.1} parent=0 // pred_check
    _
  $region11: #{tpu_custom_call.1} parent=0 // pred_check_branch
    %13 = sbr.rel (0) target = $region13
  $region12: #{tpu_custom_call.1} parent=0 // pred_region
    _
  $region13: #{tpu_custom_call.1} parent=0 // pred_fallthru
    _
  %v14 = vld [vmem:[%s0] sm:$0xff]
  %v15 = vld [vmem:[%s0 + $0x8] sm:$0xff]
  %v16 = vld [vmem:[%s0 + $0x10] sm:$0xff]
  %v17 = vld [vmem:[%s0 + $0x18] sm:$0xff]
  %v18 = vld [vmem:[%s0 + $0x20] sm:$0xff]
  %v19 = vld [vmem:[%s0 + $0x28] sm:$0xff]
  %v20 = vld [vmem:[%s0 + $0x30] sm:$0xff]
  %v21 = vld [vmem:[%s0 + $0x38] sm:$0xff]
  %v22 = vld [vmem:[%s0 + $0x40] sm:$0xff]
  %v23 = vld [vmem:[%s0 + $0x48] sm:$0xff]
  %v24 = vld [vmem:[%s0 + $0x50] sm:$0xff]
  %v25 = vld [vmem:[%s0 + $0x58] sm:$0xff]
  %v26 = vld [vmem:[%s0 + $0x60] sm:$0xff]
  %v27 = vld [vmem:[%s0 + $0x68] sm:$0xff]
  %v28 = vld [vmem:[%s0 + $0x70] sm:$0xff]
  %v29 = vld [vmem:[%s0 + $0x78] sm:$0xff]
  %v30 = vld [vmem:[%s2] sm:$0xff]
  %v31 = vld [vmem:[%s2 + $0x8] sm:$0xff]
  %v32 = vld [vmem:[%s2 + $0x10] sm:$0xff]
  %v33 = vld [vmem:[%s2 + $0x18] sm:$0xff]
  %v34 = vld [vmem:[%s2 + $0x20] sm:$0xff]
  %v35 = vld [vmem:[%s2 + $0x28] sm:$0xff]
  %v36 = vld [vmem:[%s2 + $0x30] sm:$0xff]
  %v37 = vld [vmem:[%s2 + $0x38] sm:$0xff]
  %vm38 = vcmask 261120
  %v40 = vsel %vm38, %v15, 0
  %v43 = vsel %vm38, %v16, 0
  %v46 = vsel %vm38, %v17, 0
  %v49 = vsel %vm38, %v18, 0
  %v52 = vsel %vm38, %v19, 0
  %v55 = vsel %vm38, %v20, 0
  %v58 = vsel %vm38, %v21, 0
  %v61 = vsel %vm38, %v22, 0
  %v64 = vsel %vm38, %v23, 0
  %v67 = vsel %vm38, %v24, 0
  %v70 = vsel %vm38, %v25, 0
  %v73 = vsel %vm38, %v26, 0
  %v76 = vsel %vm38, %v27, 0
  %v79 = vsel %vm38, %v28, 0
  %81 = vmatprep.subr.mxu0 0.0
  %82 = vmatpush1.msra.mxu0 %v34
  %83 = vmatprep.subr.mxu0 0.0
  %84 = vmatpush1.msra.mxu0 %v35
  %85 = vmatprep.subr.mxu0 0.0
  %86 = vmatpush1.msra.mxu0 %v36
  %87 = vmatprep.subr.mxu0 0.0
  %88 = vmatpush1.msra.mxu0 %v37
  %89 = vmatprep.subr.mxu0 0.0
  %90 = vmatpush1.msra.mxu0 0.0
  %91 = vmatprep.subr.mxu0 0.0
  %92 = vmatpush1.msra.mxu0 0.0
  %93 = vmatprep.subr.mxu0 0.0
  %94 = vmatpush1.msra.mxu0 0.0
  %95 = vmatprep.subr.mxu0 0.0
  %96 = vmatpush1.msra.mxu0 0.0
  %97 = vmatprep.subr.mxu0 0.0
  %98 = vmatpush1.msra.mxu0 0.0
  %99 = vmatprep.subr.mxu0 0.0
  %100 = vmatpush1.msra.mxu0 0.0
  %101 = vmatprep.subr.mxu0 0.0
  %102 = vmatpush1.msra.mxu0 0.0
  %103 = vmatprep.subr.mxu0 0.0
  %104 = vmatpush1.msra.mxu0 0.0
  %105 = vmatprep.subr.mxu0 0.0
  %106 = vmatpush1.msra.mxu0 0.0
  %107 = vmatprep.subr.mxu0 0.0
  %108 = vmatpush1.msra.mxu0 0.0
  %109 = vmatprep.subr.mxu0 0.0
  %110 = vmatpush1.msra.mxu0 0.0
  %111 = vmatprep.subr.mxu0 0.0
  %112 = vmatpush1.msra.mxu0 0.0
  %113 = vmatprep.subr.mxu0 0.0
  %114 = vmatpush1.msra.mxu0 0.0
  %115 = vmatprep.subr.mxu0 0.0
  %116 = vmatpush1.msra.mxu0 0.0
  %117 = vmatprep.subr.mxu0 0.0
  %118 = vmatpush1.msra.mxu0 0.0
  %119 = vmatprep.subr.mxu0 0.0
  %120 = vmatpush1.msra.mxu0 0.0
  %121 = vmatprep.subr.mxu0 0.0
  %122 = vmatpush1.msra.mxu0 0.0
  %123 = vmatprep.subr.mxu0 0.0
  %124 = vmatpush1.msra.mxu0 0.0
  %125 = vmatprep.subr.mxu0 0.0
  %126 = vmatpush1.msra.mxu0 0.0
  %127 = vmatprep.subr.mxu0 0.0
  %128 = vmatpush1.msra.mxu0 0.0
  %129 = vmatprep.subr.mxu0 0.0
  %130 = vmatpush1.msra.mxu0 0.0
  %131 = vmatprep.subr.mxu0 0.0
  %132 = vmatpush1.msra.mxu0 0.0
  %133 = vmatprep.subr.mxu0 0.0
  %134 = vmatpush1.msra.mxu0 0.0
  %135 = vmatprep.subr.mxu0 0.0
  %136 = vmatpush1.msra.mxu0 0.0
  %137 = vmatprep.subr.mxu0 0.0
  %138 = vmatpush1.msra.mxu0 0.0
  %139 = vmatprep.subr.mxu0 0.0
  %140 = vmatpush1.msra.mxu0 0.0
  %141 = vmatprep.subr.mxu0 0.0
  %142 = vmatpush1.msra.mxu0 0.0
  %143 = vmatprep.subr.mxu0 0.0
  %144 = vmatpush1.msra.mxu0 0.0
  %145 = vmatprep.mubr.f32.mxu0 0.0
  %146 = vmatmul.mubr.f32.gmra.mrb[0].mxu0 %v40
  %v147 = vpop.f32.mrb[0].mxu0
  %v148 = vadd.f32 0.0, %v147
  %v149 = vpop.f32.mrb[0].mxu0
  %150 = vmatprep.mubr.f32.mxu0 0.0
  %151 = vmatmul.mubr.f32.gmra.mrb[0].mxu0 %v43
  %v152 = vpop.f32.mrb[0].mxu0
  %v153 = vadd.f32 0.0, %v152
  %v154 = vpop.f32.mrb[0].mxu0
  %155 = vmatprep.mubr.f32.mxu0 0.0
  %156 = vmatmul.mubr.f32.gmra.mrb[0].mxu0 %v46
  %v157 = vpop.f32.mrb[0].mxu0
  %v158 = vadd.f32 0.0, %v157
  %v159 = vpop.f32.mrb[0].mxu0
  %160 = vmatprep.mubr.f32.mxu0 0.0
  %161 = vmatmul.mubr.f32.gmra.mrb[0].mxu0 %v49
  %v162 = vpop.f32.mrb[0].mxu0
  %v163 = vadd.f32 0.0, %v162
  %v164 = vpop.f32.mrb[0].mxu0
  %165 = vmatprep.mubr.f32.mxu0 0.0
  %166 = vmatmul.mubr.f32.gmra.mrb[0].mxu0 %v52
  %v167 = vpop.f32.mrb[0].mxu0
  %v168 = vadd.f32 0.0, %v167
  %v169 = vpop.f32.mrb[0].mxu0
  %170 = vmatprep.mubr.f32.mxu0 0.0
  %171 = vmatmul.mubr.f32.gmra.mrb[0].mxu0 %v55
  %v172 = vpop.f32.mrb[0].mxu0
  %v173 = vadd.f32 0.0, %v172
  %v174 = vpop.f32.mrb[0].mxu0
  %175 = vmatprep.mubr.f32.mxu0 0.0
  %176 = vmatmul.mubr.f32.gmra.mrb[0].mxu0 %v58
  %v177 = vpop.f32.mrb[0].mxu0
  %v178 = vadd.f32 0.0, %v177
  %v179 = vpop.f32.mrb[0].mxu0
  %180 = vmatprep.mubr.f32.mxu0 0.0
  %181 = vmatmul.mubr.f32.gmra.mrb[0].mxu0 %v61
  %v182 = vpop.f32.mrb[0].mxu0
  %v183 = vadd.f32 0.0, %v182
  %v184 = vpop.f32.mrb[0].mxu0
  %185 = vmatprep.mubr.f32.mxu0 0.0
  %186 = vmatmul.mubr.f32.gmra.mrb[0].mxu0 %v64
  %v187 = vpop.f32.mrb[0].mxu0
  %v188 = vadd.f32 0.0, %v187
  %v189 = vpop.f32.mrb[0].mxu0
  %190 = vmatprep.mubr.f32.mxu0 0.0
  %191 = vmatmul.mubr.f32.gmra.mrb[0].mxu0 %v67
  %v192 = vpop.f32.mrb[0].mxu0
  %v193 = vadd.f32 0.0, %v192
  %v194 = vpop.f32.mrb[0].mxu0
  %195 = vmatprep.mubr.f32.mxu0 0.0
  %196 = vmatmul.mubr.f32.gmra.mrb[0].mxu0 %v70
  %v197 = vpop.f32.mrb[0].mxu0
  %v198 = vadd.f32 0.0, %v197
  %v199 = vpop.f32.mrb[0].mxu0
  %200 = vmatprep.mubr.f32.mxu0 0.0
  %201 = vmatmul.mubr.f32.gmra.mrb[0].mxu0 %v73
  %v202 = vpop.f32.mrb[0].mxu0
  %v203 = vadd.f32 0.0, %v202
  %v204 = vpop.f32.mrb[0].mxu0
  %205 = vmatprep.mubr.f32.mxu0 0.0
  %206 = vmatmul.mubr.f32.gmra.mrb[0].mxu0 %v76
  %v207 = vpop.f32.mrb[0].mxu0
  %v208 = vadd.f32 0.0, %v207
  %v209 = vpop.f32.mrb[0].mxu0
  %210 = vmatprep.mubr.f32.mxu0 0.0
  %211 = vmatmul.mubr.f32.gmra.mrb[0].mxu0 %v79
  %v212 = vpop.f32.mrb[0].mxu0
  %v213 = vadd.f32 0.0, %v212
  %v214 = vpop.f32.mrb[0].mxu0
  %215 = vdwg.mxu0
  %v217 = vsel %vm38, %v14, 0
  %219 = vmatprep.subr.mxu0 0.0
  %220 = vmatpush1.msra.mxu0 %v30
  %221 = vmatprep.subr.mxu0 0.0
  %222 = vmatpush1.msra.mxu0 %v31
  %223 = vmatprep.subr.mxu0 0.0
  %224 = vmatpush1.msra.mxu0 %v32
  %225 = vmatprep.subr.mxu0 0.0
  %226 = vmatpush1.msra.mxu0 %v33
  %227 = vmatprep.subr.mxu0 0.0
  %228 = vmatpush1.msra.mxu0 0.0
  %229 = vmatprep.subr.mxu0 0.0
  %230 = vmatpush1.msra.mxu0 0.0
  %231 = vmatprep.subr.mxu0 0.0
  %232 = vmatpush1.msra.mxu0 0.0
  %233 = vmatprep.subr.mxu0 0.0
  %234 = vmatpush1.msra.mxu0 0.0
  %235 = vmatprep.subr.mxu0 0.0
  %236 = vmatpush1.msra.mxu0 0.0
  %237 = vmatprep.subr.mxu0 0.0
  %238 = vmatpush1.msra.mxu0 0.0
  %239 = vmatprep.subr.mxu0 0.0
  %240 = vmatpush1.msra.mxu0 0.0
  %241 = vmatprep.subr.mxu0 0.0
  %242 = vmatpush1.msra.mxu0 0.0
  %243 = vmatprep.subr.mxu0 0.0
  %244 = vmatpush1.msra.mxu0 0.0
  %245 = vmatprep.subr.mxu0 0.0
  %246 = vmatpush1.msra.mxu0 0.0
  %247 = vmatprep.subr.mxu0 0.0
  %248 = vmatpush1.msra.mxu0 0.0
  %249 = vmatprep.subr.mxu0 0.0
  %250 = vmatpush1.msra.mxu0 0.0
  %251 = vmatprep.subr.mxu0 0.0
  %252 = vmatpush1.msra.mxu0 0.0
  %253 = vmatprep.subr.mxu0 0.0
  %254 = vmatpush1.msra.mxu0 0.0
  %255 = vmatprep.subr.mxu0 0.0
  %256 = vmatpush1.msra.mxu0 0.0
  %257 = vmatprep.subr.mxu0 0.0
  %258 = vmatpush1.msra.mxu0 0.0
  %259 = vmatprep.subr.mxu0 0.0
  %260 = vmatpush1.msra.mxu0 0.0
  %261 = vmatprep.subr.mxu0 0.0
  %262 = vmatpush1.msra.mxu0 0.0
  %263 = vmatprep.subr.mxu0 0.0
  %264 = vmatpush1.msra.mxu0 0.0
  %265 = vmatprep.subr.mxu0 0.0
  %266 = vmatpush1.msra.mxu0 0.0
  %267 = vmatprep.subr.mxu0 0.0
  %268 = vmatpush1.msra.mxu0 0.0
  %269 = vmatprep.subr.mxu0 0.0
  %270 = vmatpush1.msra.mxu0 0.0
  %271 = vmatprep.subr.mxu0 0.0
  %272 = vmatpush1.msra.mxu0 0.0
  %273 = vmatprep.subr.mxu0 0.0
  %274 = vmatpush1.msra.mxu0 0.0
  %275 = vmatprep.subr.mxu0 0.0
  %276 = vmatpush1.msra.mxu0 0.0
  %277 = vmatprep.subr.mxu0 0.0
  %278 = vmatpush1.msra.mxu0 0.0
  %279 = vmatprep.subr.mxu0 0.0
  %280 = vmatpush1.msra.mxu0 0.0
  %281 = vmatprep.subr.mxu0 0.0
  %282 = vmatpush1.msra.mxu0 0.0
  %283 = vmatprep.mubr.f32.mxu0 0.0
  %284 = vmatmul.mubr.f32.gmra.mrb[0].mxu0 %v217
  %v285 = vpop.f32.mrb[0].mxu0
  %v286 = vadd.f32 %v148, %v285
  %v287 = vpop.f32.mrb[0].mxu0
  %288 = vmatprep.mubr.f32.mxu0 0.0
  %289 = vmatmul.mubr.f32.gmra.mrb[0].mxu0 %v40
  %v290 = vpop.f32.mrb[0].mxu0
  %v291 = vadd.f32 %v153, %v290
  %v292 = vpop.f32.mrb[0].mxu0
  %293 = vmatprep.mubr.f32.mxu0 0.0
  %294 = vmatmul.mubr.f32.gmra.mrb[0].mxu0 %v43
  %v295 = vpop.f32.mrb[0].mxu0
  %v296 = vadd.f32 %v158, %v295
  %v297 = vpop.f32.mrb[0].mxu0
  %298 = vmatprep.mubr.f32.mxu0 0.0
  %299 = vmatmul.mubr.f32.gmra.mrb[0].mxu0 %v46
  %v300 = vpop.f32.mrb[0].mxu0
  %v301 = vadd.f32 %v163, %v300
  %v302 = vpop.f32.mrb[0].mxu0
  %303 = vmatprep.mubr.f32.mxu0 0.0
  %304 = vmatmul.mubr.f32.gmra.mrb[0].mxu0 %v49
  %v305 = vpop.f32.mrb[0].mxu0
  %v306 = vadd.f32 %v168, %v305
  %v307 = vpop.f32.mrb[0].mxu0
  %308 = vmatprep.mubr.f32.mxu0 0.0
  %309 = vmatmul.mubr.f32.gmra.mrb[0].mxu0 %v52
  %v310 = vpop.f32.mrb[0].mxu0
  %v311 = vadd.f32 %v173, %v310
  %v312 = vpop.f32.mrb[0].mxu0
  %313 = vmatprep.mubr.f32.mxu0 0.0
  %314 = vmatmul.mubr.f32.gmra.mrb[0].mxu0 %v55
  %v315 = vpop.f32.mrb[0].mxu0
  %v316 = vadd.f32 %v178, %v315
  %v317 = vpop.f32.mrb[0].mxu0
  %318 = vmatprep.mubr.f32.mxu0 0.0
  %319 = vmatmul.mubr.f32.gmra.mrb[0].mxu0 %v58
  %v320 = vpop.f32.mrb[0].mxu0
  %v321 = vadd.f32 %v183, %v320
  %v322 = vpop.f32.mrb[0].mxu0
  %323 = vmatprep.mubr.f32.mxu0 0.0
  %324 = vmatmul.mubr.f32.gmra.mrb[0].mxu0 %v61
  %v325 = vpop.f32.mrb[0].mxu0
  %v326 = vadd.f32 %v188, %v325
  %v327 = vpop.f32.mrb[0].mxu0
  %328 = vmatprep.mubr.f32.mxu0 0.0
  %329 = vmatmul.mubr.f32.gmra.mrb[0].mxu0 %v64
  %v330 = vpop.f32.mrb[0].mxu0
  %v331 = vadd.f32 %v193, %v330
  %v332 = vpop.f32.mrb[0].mxu0
  %333 = vmatprep.mubr.f32.mxu0 0.0
  %334 = vmatmul.mubr.f32.gmra.mrb[0].mxu0 %v67
  %v335 = vpop.f32.mrb[0].mxu0
  %v336 = vadd.f32 %v198, %v335
  %v337 = vpop.f32.mrb[0].mxu0
  %338 = vmatprep.mubr.f32.mxu0 0.0
  %339 = vmatmul.mubr.f32.gmra.mrb[0].mxu0 %v70
  %v340 = vpop.f32.mrb[0].mxu0
  %v341 = vadd.f32 %v203, %v340
  %v342 = vpop.f32.mrb[0].mxu0
  %343 = vmatprep.mubr.f32.mxu0 0.0
  %344 = vmatmul.mubr.f32.gmra.mrb[0].mxu0 %v73
  %v345 = vpop.f32.mrb[0].mxu0
  %v346 = vadd.f32 %v208, %v345
  %v347 = vpop.f32.mrb[0].mxu0
  %348 = vmatprep.mubr.f32.mxu0 0.0
  %349 = vmatmul.mubr.f32.gmra.mrb[0].mxu0 %v76
  %v350 = vpop.f32.mrb[0].mxu0
  %v351 = vadd.f32 %v213, %v350
  %v352 = vpop.f32.mrb[0].mxu0
  %353 = vdwg.mxu0
  %v354 = vld [vmem:[%s2 + $0x40] sm:$0xff]
  %v355 = vld [vmem:[%s2 + $0x48] sm:$0xff]
  %v356 = vld [vmem:[%s2 + $0x50] sm:$0xff]
  %v357 = vld [vmem:[%s2 + $0x58] sm:$0xff]
  %v359 = vsel %vm38, %v29, 0
  %361 = vmatprep.subr.mxu0 0.0
  %362 = vmatpush1.msra.mxu0 %v354
  %363 = vmatprep.subr.mxu0 0.0
  %364 = vmatpush1.msra.mxu0 %v355
  %365 = vmatprep.subr.mxu0 0.0
  %366 = vmatpush1.msra.mxu0 %v356
  %367 = vmatprep.subr.mxu0 0.0
  %368 = vmatpush1.msra.mxu0 %v357
  %369 = vmatprep.subr.mxu0 0.0
  %370 = vmatpush1.msra.mxu0 0.0
  %371 = vmatprep.subr.mxu0 0.0
  %372 = vmatpush1.msra.mxu0 0.0
  %373 = vmatprep.subr.mxu0 0.0
  %374 = vmatpush1.msra.mxu0 0.0
  %375 = vmatprep.subr.mxu0 0.0
  %376 = vmatpush1.msra.mxu0 0.0
  %377 = vmatprep.subr.mxu0 0.0
  %378 = vmatpush1.msra.mxu0 0.0
  %379 = vmatprep.subr.mxu0 0.0
  %380 = vmatpush1.msra.mxu0 0.0
  %381 = vmatprep.subr.mxu0 0.0
  %382 = vmatpush1.msra.mxu0 0.0
  %383 = vmatprep.subr.mxu0 0.0
  %384 = vmatpush1.msra.mxu0 0.0
  %385 = vmatprep.subr.mxu0 0.0
  %386 = vmatpush1.msra.mxu0 0.0
  %387 = vmatprep.subr.mxu0 0.0
  %388 = vmatpush1.msra.mxu0 0.0
  %389 = vmatprep.subr.mxu0 0.0
  %390 = vmatpush1.msra.mxu0 0.0
  %391 = vmatprep.subr.mxu0 0.0
  %392 = vmatpush1.msra.mxu0 0.0
  %393 = vmatprep.subr.mxu0 0.0
  %394 = vmatpush1.msra.mxu0 0.0
  %395 = vmatprep.subr.mxu0 0.0
  %396 = vmatpush1.msra.mxu0 0.0
  %397 = vmatprep.subr.mxu0 0.0
  %398 = vmatpush1.msra.mxu0 0.0
  %399 = vmatprep.subr.mxu0 0.0
  %400 = vmatpush1.msra.mxu0 0.0
  %401 = vmatprep.subr.mxu0 0.0
  %402 = vmatpush1.msra.mxu0 0.0
  %403 = vmatprep.subr.mxu0 0.0
  %404 = vmatpush1.msra.mxu0 0.0
  %405 = vmatprep.subr.mxu0 0.0
  %406 = vmatpush1.msra.mxu0 0.0
  %407 = vmatprep.subr.mxu0 0.0
  %408 = vmatpush1.msra.mxu0 0.0
  %409 = vmatprep.subr.mxu0 0.0
  %410 = vmatpush1.msra.mxu0 0.0
  %411 = vmatprep.subr.mxu0 0.0
  %412 = vmatpush1.msra.mxu0 0.0
  %413 = vmatprep.subr.mxu0 0.0
  %414 = vmatpush1.msra.mxu0 0.0
  %415 = vmatprep.subr.mxu0 0.0
  %416 = vmatpush1.msra.mxu0 0.0
  %417 = vmatprep.subr.mxu0 0.0
  %418 = vmatpush1.msra.mxu0 0.0
  %419 = vmatprep.subr.mxu0 0.0
  %420 = vmatpush1.msra.mxu0 0.0
  %421 = vmatprep.subr.mxu0 0.0
  %422 = vmatpush1.msra.mxu0 0.0
  %423 = vmatprep.subr.mxu0 0.0
  %424 = vmatpush1.msra.mxu0 0.0
  %425 = vmatprep.mubr.f32.mxu0 0.0
  %426 = vmatmul.mubr.f32.gmra.mrb[0].mxu0 %v43
  %v427 = vpop.f32.mrb[0].mxu0
  %v428 = vadd.f32 0.0, %v427
  %v429 = vpop.f32.mrb[0].mxu0
  %430 = vmatprep.mubr.f32.mxu0 0.0
  %431 = vmatmul.mubr.f32.gmra.mrb[0].mxu0 %v46
  %v432 = vpop.f32.mrb[0].mxu0
  %v433 = vadd.f32 0.0, %v432
  %v434 = vpop.f32.mrb[0].mxu0
  %435 = vmatprep.mubr.f32.mxu0 0.0
  %436 = vmatmul.mubr.f32.gmra.mrb[0].mxu0 %v49
  %v437 = vpop.f32.mrb[0].mxu0
  %v438 = vadd.f32 0.0, %v437
  %v439 = vpop.f32.mrb[0].mxu0
  %440 = vmatprep.mubr.f32.mxu0 0.0
  %441 = vmatmul.mubr.f32.gmra.mrb[0].mxu0 %v52
  %v442 = vpop.f32.mrb[0].mxu0
  %v443 = vadd.f32 0.0, %v442
  %v444 = vpop.f32.mrb[0].mxu0
  %445 = vmatprep.mubr.f32.mxu0 0.0
  %446 = vmatmul.mubr.f32.gmra.mrb[0].mxu0 %v55
  %v447 = vpop.f32.mrb[0].mxu0
  %v448 = vadd.f32 0.0, %v447
  %v449 = vpop.f32.mrb[0].mxu0
  %450 = vmatprep.mubr.f32.mxu0 0.0
  %451 = vmatmul.mubr.f32.gmra.mrb[0].mxu0 %v58
  %v452 = vpop.f32.mrb[0].mxu0
  %v453 = vadd.f32 0.0, %v452
  %v454 = vpop.f32.mrb[0].mxu0
  %455 = vmatprep.mubr.f32.mxu0 0.0
  %456 = vmatmul.mubr.f32.gmra.mrb[0].mxu0 %v61
  %v457 = vpop.f32.mrb[0].mxu0
  %v458 = vadd.f32 0.0, %v457
  %v459 = vpop.f32.mrb[0].mxu0
  %460 = vmatprep.mubr.f32.mxu0 0.0
  %461 = vmatmul.mubr.f32.gmra.mrb[0].mxu0 %v64
  %v462 = vpop.f32.mrb[0].mxu0
  %v463 = vadd.f32 0.0, %v462
  %v464 = vpop.f32.mrb[0].mxu0
  %465 = vmatprep.mubr.f32.mxu0 0.0
  %466 = vmatmul.mubr.f32.gmra.mrb[0].mxu0 %v67
  %v467 = vpop.f32.mrb[0].mxu0
  %v468 = vadd.f32 0.0, %v467
  %v469 = vpop.f32.mrb[0].mxu0
  %470 = vmatprep.mubr.f32.mxu0 0.0
  %471 = vmatmul.mubr.f32.gmra.mrb[0].mxu0 %v70
  %v472 = vpop.f32.mrb[0].mxu0
  %v473 = vadd.f32 0.0, %v472
  %v474 = vpop.f32.mrb[0].mxu0
  %475 = vmatprep.mubr.f32.mxu0 0.0
  %476 = vmatmul.mubr.f32.gmra.mrb[0].mxu0 %v73
  %v477 = vpop.f32.mrb[0].mxu0
  %v478 = vadd.f32 0.0, %v477
  %v479 = vpop.f32.mrb[0].mxu0
  %480 = vmatprep.mubr.f32.mxu0 0.0
  %481 = vmatmul.mubr.f32.gmra.mrb[0].mxu0 %v76
  %v482 = vpop.f32.mrb[0].mxu0
  %v483 = vadd.f32 0.0, %v482
  %v484 = vpop.f32.mrb[0].mxu0
  %485 = vmatprep.mubr.f32.mxu0 0.0
  %486 = vmatmul.mubr.f32.gmra.mrb[0].mxu0 %v79
  %v487 = vpop.f32.mrb[0].mxu0
  %v488 = vadd.f32 0.0, %v487
  %v489 = vpop.f32.mrb[0].mxu0
  %490 = vmatprep.mubr.f32.mxu0 0.0
  %491 = vmatmul.mubr.f32.gmra.mrb[0].mxu0 %v359
  %v492 = vpop.f32.mrb[0].mxu0
  %v493 = vadd.f32 0.0, %v492
  %v494 = vpop.f32.mrb[0].mxu0
  %495 = vdwg.mxu0
  %v496 = vadd.f32 %v286, %v428
  %v497 = vadd.f32 %v291, %v433
  %v498 = vadd.f32 %v296, %v438
  %v499 = vadd.f32 %v301, %v443
  %v500 = vadd.f32 %v306, %v448
  %v501 = vadd.f32 %v311, %v453
  %v502 = vadd.f32 %v316, %v458
  %v503 = vadd.f32 %v321, %v463
  %v504 = vadd.f32 %v326, %v468
  %v505 = vadd.f32 %v331, %v473
  %v506 = vadd.f32 %v336, %v478
  %v507 = vadd.f32 %v341, %v483
  %v508 = vadd.f32 %v346, %v488
  %v509 = vadd.f32 %v351, %v493
  %v510 = vld [vmem:[%s2 + $0x60] sm:$0x1]
  %v511 = vlaneseq
  %v512 = vshrl.u32 %v511, 7
  %v513 = vsub.s32 0, %v512
  %v514 = vrot.slane %v510, %v513
  %v515 = vadd.f32 %v496, %v514
  %v516 = vadd.f32 %v497, %v514
  %v517 = vadd.f32 %v498, %v514
  %v518 = vadd.f32 %v499, %v514
  %v519 = vadd.f32 %v500, %v514
  %v520 = vadd.f32 %v501, %v514
  %v521 = vadd.f32 %v502, %v514
  %v522 = vadd.f32 %v503, %v514
  %v523 = vadd.f32 %v504, %v514
  %v524 = vadd.f32 %v505, %v514
  %v525 = vadd.f32 %v506, %v514
  %v526 = vadd.f32 %v507, %v514
  %v527 = vadd.f32 %v508, %v514
  %v528 = vadd.f32 %v509, %v514
  %v529 = vld [vmem:[%s2 + $0xa0] sm:$0x1]
  %vm530 = vcmp.gt.f32.partialorder %v515, 0.0
  %vm531 = vcmp.gt.f32.partialorder %v516, 0.0
  %vm532 = vcmp.gt.f32.partialorder %v517, 0.0
  %vm533 = vcmp.gt.f32.partialorder %v518, 0.0
  %vm534 = vcmp.gt.f32.partialorder %v519, 0.0
  %vm535 = vcmp.gt.f32.partialorder %v520, 0.0
  %vm536 = vcmp.gt.f32.partialorder %v521, 0.0
  %vm537 = vcmp.gt.f32.partialorder %v522, 0.0
  %vm538 = vcmp.gt.f32.partialorder %v523, 0.0
  %vm539 = vcmp.gt.f32.partialorder %v524, 0.0
  %vm540 = vcmp.gt.f32.partialorder %v525, 0.0
  %vm541 = vcmp.gt.f32.partialorder %v526, 0.0
  %vm542 = vcmp.gt.f32.partialorder %v527, 0.0
  %vm543 = vcmp.gt.f32.partialorder %v528, 0.0
  %v544 = vlaneseq
  %v545 = vshrl.u32 %v544, 7
  %v546 = vsub.s32 0, %v545
  %v547 = vrot.slane %v529, %v546
  %v548 = vmul.f32 %v515, %v547
  %v549 = vmul.f32 %v516, %v547
  %v550 = vmul.f32 %v517, %v547
  %v551 = vmul.f32 %v518, %v547
  %v552 = vmul.f32 %v519, %v547
  %v553 = vmul.f32 %v520, %v547
  %v554 = vmul.f32 %v521, %v547
  %v555 = vmul.f32 %v522, %v547
  %v556 = vmul.f32 %v523, %v547
  %v557 = vmul.f32 %v524, %v547
  %v558 = vmul.f32 %v525, %v547
  %v559 = vmul.f32 %v526, %v547
  %v560 = vmul.f32 %v527, %v547
  %v561 = vmul.f32 %v528, %v547
  %v562 = vsel %vm530, %v515, %v548
  %v563 = vsel %vm531, %v516, %v549
  %v564 = vsel %vm532, %v517, %v550
  %v565 = vsel %vm533, %v518, %v551
  %v566 = vsel %vm534, %v519, %v552
  %v567 = vsel %vm535, %v520, %v553
  %v568 = vsel %vm536, %v521, %v554
  %v569 = vsel %vm537, %v522, %v555
  %v570 = vsel %vm538, %v523, %v556
  %v571 = vsel %vm539, %v524, %v557
  %v572 = vsel %vm540, %v525, %v558
  %v573 = vsel %vm541, %v526, %v559
  %v574 = vsel %vm542, %v527, %v560
  %v575 = vsel %vm543, %v528, %v561
  %v576 = vld [vmem:[%s2 + $0x68] sm:$0xff]
  %v577 = vld [vmem:[%s2 + $0x70] sm:$0xff]
  %v578 = vld [vmem:[%s2 + $0x78] sm:$0xff]
  %v579 = vld [vmem:[%s2 + $0x80] sm:$0xff]
  %vm580 = vcmask 130048
  %v582 = vsel %vm580, %v563, 0
  %v585 = vsel %vm580, %v564, 0
  %v588 = vsel %vm580, %v565, 0
  %v591 = vsel %vm580, %v566, 0
  %v594 = vsel %vm580, %v567, 0
  %v597 = vsel %vm580, %v568, 0
  %v600 = vsel %vm580, %v569, 0
  %v603 = vsel %vm580, %v570, 0
  %v606 = vsel %vm580, %v571, 0
  %v609 = vsel %vm580, %v572, 0
  %v612 = vsel %vm580, %v573, 0
  %v615 = vsel %vm580, %v574, 0
  %617 = vmatprep.subr.mxu0 0.0
  %618 = vmatpush1.msra.mxu0 %v578
  %619 = vmatprep.subr.mxu0 0.0
  %620 = vmatpush1.msra.mxu0 %v579
  %621 = vmatprep.subr.mxu0 0.0
  %622 = vmatpush1.msra.mxu0 0.0
  %623 = vmatprep.subr.mxu0 0.0
  %624 = vmatpush1.msra.mxu0 0.0
  %625 = vmatprep.subr.mxu0 0.0
  %626 = vmatpush1.msra.mxu0 0.0
  %627 = vmatprep.subr.mxu0 0.0
  %628 = vmatpush1.msra.mxu0 0.0
  %629 = vmatprep.subr.mxu0 0.0
  %630 = vmatpush1.msra.mxu0 0.0
  %631 = vmatprep.subr.mxu0 0.0
  %632 = vmatpush1.msra.mxu0 0.0
  %633 = vmatprep.subr.mxu0 0.0
  %634 = vmatpush1.msra.mxu0 0.0
  %635 = vmatprep.subr.mxu0 0.0
  %636 = vmatpush1.msra.mxu0 0.0
  %637 = vmatprep.subr.mxu0 0.0
  %638 = vmatpush1.msra.mxu0 0.0
  %639 = vmatprep.subr.mxu0 0.0
  %640 = vmatpush1.msra.mxu0 0.0
  %641 = vmatprep.subr.mxu0 0.0
  %642 = vmatpush1.msra.mxu0 0.0
  %643 = vmatprep.subr.mxu0 0.0
  %644 = vmatpush1.msra.mxu0 0.0
  %645 = vmatprep.subr.mxu0 0.0
  %646 = vmatpush1.msra.mxu0 0.0
  %647 = vmatprep.subr.mxu0 0.0
  %648 = vmatpush1.msra.mxu0 0.0
  %649 = vmatprep.subr.mxu0 0.0
  %650 = vmatpush1.msra.mxu0 0.0
  %651 = vmatprep.subr.mxu0 0.0
  %652 = vmatpush1.msra.mxu0 0.0
  %653 = vmatprep.subr.mxu0 0.0
  %654 = vmatpush1.msra.mxu0 0.0
  %655 = vmatprep.subr.mxu0 0.0
  %656 = vmatpush1.msra.mxu0 0.0
  %657 = vmatprep.subr.mxu0 0.0
  %658 = vmatpush1.msra.mxu0 0.0
  %659 = vmatprep.subr.mxu0 0.0
  %660 = vmatpush1.msra.mxu0 0.0
  %661 = vmatprep.subr.mxu0 0.0
  %662 = vmatpush1.msra.mxu0 0.0
  %663 = vmatprep.subr.mxu0 0.0
  %664 = vmatpush1.msra.mxu0 0.0
  %665 = vmatprep.subr.mxu0 0.0
  %666 = vmatpush1.msra.mxu0 0.0
  %667 = vmatprep.subr.mxu0 0.0
  %668 = vmatpush1.msra.mxu0 0.0
  %669 = vmatprep.subr.mxu0 0.0
  %670 = vmatpush1.msra.mxu0 0.0
  %671 = vmatprep.subr.mxu0 0.0
  %672 = vmatpush1.msra.mxu0 0.0
  %673 = vmatprep.subr.mxu0 0.0
  %674 = vmatpush1.msra.mxu0 0.0
  %675 = vmatprep.subr.mxu0 0.0
  %676 = vmatpush1.msra.mxu0 0.0
  %677 = vmatprep.subr.mxu0 0.0
  %678 = vmatpush1.msra.mxu0 0.0
  %679 = vmatprep.subr.mxu0 0.0
  %680 = vmatpush1.msra.mxu0 0.0
  %681 = vmatprep.mubr.f32.mxu0 0.0
  %682 = vmatmul.mubr.f32.gmra.mrb[0].mxu0 %v582
  %v683 = vpop.f32.mrb[0].mxu0
  %v684 = vadd.f32 0.0, %v683
  %v685 = vpop.f32.mrb[0].mxu0
  %686 = vmatprep.mubr.f32.mxu0 0.0
  %687 = vmatmul.mubr.f32.gmra.mrb[0].mxu0 %v585
  %v688 = vpop.f32.mrb[0].mxu0
  %v689 = vadd.f32 0.0, %v688
  %v690 = vpop.f32.mrb[0].mxu0
  %691 = vmatprep.mubr.f32.mxu0 0.0
  %692 = vmatmul.mubr.f32.gmra.mrb[0].mxu0 %v588
  %v693 = vpop.f32.mrb[0].mxu0
  %v694 = vadd.f32 0.0, %v693
  %v695 = vpop.f32.mrb[0].mxu0
  %696 = vmatprep.mubr.f32.mxu0 0.0
  %697 = vmatmul.mubr.f32.gmra.mrb[0].mxu0 %v591
  %v698 = vpop.f32.mrb[0].mxu0
  %v699 = vadd.f32 0.0, %v698
  %v700 = vpop.f32.mrb[0].mxu0
  %701 = vmatprep.mubr.f32.mxu0 0.0
  %702 = vmatmul.mubr.f32.gmra.mrb[0].mxu0 %v594
  %v703 = vpop.f32.mrb[0].mxu0
  %v704 = vadd.f32 0.0, %v703
  %v705 = vpop.f32.mrb[0].mxu0
  %706 = vmatprep.mubr.f32.mxu0 0.0
  %707 = vmatmul.mubr.f32.gmra.mrb[0].mxu0 %v597
  %v708 = vpop.f32.mrb[0].mxu0
  %v709 = vadd.f32 0.0, %v708
  %v710 = vpop.f32.mrb[0].mxu0
  %711 = vmatprep.mubr.f32.mxu0 0.0
  %712 = vmatmul.mubr.f32.gmra.mrb[0].mxu0 %v600
  %v713 = vpop.f32.mrb[0].mxu0
  %v714 = vadd.f32 0.0, %v713
  %v715 = vpop.f32.mrb[0].mxu0
  %716 = vmatprep.mubr.f32.mxu0 0.0
  %717 = vmatmul.mubr.f32.gmra.mrb[0].mxu0 %v603
  %v718 = vpop.f32.mrb[0].mxu0
  %v719 = vadd.f32 0.0, %v718
  %v720 = vpop.f32.mrb[0].mxu0
  %721 = vmatprep.mubr.f32.mxu0 0.0
  %722 = vmatmul.mubr.f32.gmra.mrb[0].mxu0 %v606
  %v723 = vpop.f32.mrb[0].mxu0
  %v724 = vadd.f32 0.0, %v723
  %v725 = vpop.f32.mrb[0].mxu0
  %726 = vmatprep.mubr.f32.mxu0 0.0
  %727 = vmatmul.mubr.f32.gmra.mrb[0].mxu0 %v609
  %v728 = vpop.f32.mrb[0].mxu0
  %v729 = vadd.f32 0.0, %v728
  %v730 = vpop.f32.mrb[0].mxu0
  %731 = vmatprep.mubr.f32.mxu0 0.0
  %732 = vmatmul.mubr.f32.gmra.mrb[0].mxu0 %v612
  %v733 = vpop.f32.mrb[0].mxu0
  %v734 = vadd.f32 0.0, %v733
  %v735 = vpop.f32.mrb[0].mxu0
  %736 = vmatprep.mubr.f32.mxu0 0.0
  %737 = vmatmul.mubr.f32.gmra.mrb[0].mxu0 %v615
  %v738 = vpop.f32.mrb[0].mxu0
  %v739 = vadd.f32 0.0, %v738
  %v740 = vpop.f32.mrb[0].mxu0
  %741 = vdwg.mxu0
  %v743 = vsel %vm580, %v562, 0
  %745 = vmatprep.subr.mxu0 0.0
  %746 = vmatpush1.msra.mxu0 %v576
  %747 = vmatprep.subr.mxu0 0.0
  %748 = vmatpush1.msra.mxu0 %v577
  %749 = vmatprep.subr.mxu0 0.0
  %750 = vmatpush1.msra.mxu0 0.0
  %751 = vmatprep.subr.mxu0 0.0
  %752 = vmatpush1.msra.mxu0 0.0
  %753 = vmatprep.subr.mxu0 0.0
  %754 = vmatpush1.msra.mxu0 0.0
  %755 = vmatprep.subr.mxu0 0.0
  %756 = vmatpush1.msra.mxu0 0.0
  %757 = vmatprep.subr.mxu0 0.0
  %758 = vmatpush1.msra.mxu0 0.0
  %759 = vmatprep.subr.mxu0 0.0
  %760 = vmatpush1.msra.mxu0 0.0
  %761 = vmatprep.subr.mxu0 0.0
  %762 = vmatpush1.msra.mxu0 0.0
  %763 = vmatprep.subr.mxu0 0.0
  %764 = vmatpush1.msra.mxu0 0.0
  %765 = vmatprep.subr.mxu0 0.0
  %766 = vmatpush1.msra.mxu0 0.0
  %767 = vmatprep.subr.mxu0 0.0
  %768 = vmatpush1.msra.mxu0 0.0
  %769 = vmatprep.subr.mxu0 0.0
  %770 = vmatpush1.msra.mxu0 0.0
  %771 = vmatprep.subr.mxu0 0.0
  %772 = vmatpush1.msra.mxu0 0.0
  %773 = vmatprep.subr.mxu0 0.0
  %774 = vmatpush1.msra.mxu0 0.0
  %775 = vmatprep.subr.mxu0 0.0
  %776 = vmatpush1.msra.mxu0 0.0
  %777 = vmatprep.subr.mxu0 0.0
  %778 = vmatpush1.msra.mxu0 0.0
  %779 = vmatprep.subr.mxu0 0.0
  %780 = vmatpush1.msra.mxu0 0.0
  %781 = vmatprep.subr.mxu0 0.0
  %782 = vmatpush1.msra.mxu0 0.0
  %783 = vmatprep.subr.mxu0 0.0
  %784 = vmatpush1.msra.mxu0 0.0
  %785 = vmatprep.subr.mxu0 0.0
  %786 = vmatpush1.msra.mxu0 0.0
  %787 = vmatprep.subr.mxu0 0.0
  %788 = vmatpush1.msra.mxu0 0.0
  %789 = vmatprep.subr.mxu0 0.0
  %790 = vmatpush1.msra.mxu0 0.0
  %791 = vmatprep.subr.mxu0 0.0
  %792 = vmatpush1.msra.mxu0 0.0
  %793 = vmatprep.subr.mxu0 0.0
  %794 = vmatpush1.msra.mxu0 0.0
  %795 = vmatprep.subr.mxu0 0.0
  %796 = vmatpush1.msra.mxu0 0.0
  %797 = vmatprep.subr.mxu0 0.0
  %798 = vmatpush1.msra.mxu0 0.0
  %799 = vmatprep.subr.mxu0 0.0
  %800 = vmatpush1.msra.mxu0 0.0
  %801 = vmatprep.subr.mxu0 0.0
  %802 = vmatpush1.msra.mxu0 0.0
  %803 = vmatprep.subr.mxu0 0.0
  %804 = vmatpush1.msra.mxu0 0.0
  %805 = vmatprep.subr.mxu0 0.0
  %806 = vmatpush1.msra.mxu0 0.0
  %807 = vmatprep.subr.mxu0 0.0
  %808 = vmatpush1.msra.mxu0 0.0
  %809 = vmatprep.mubr.f32.mxu0 0.0
  %810 = vmatmul.mubr.f32.gmra.mrb[0].mxu0 %v743
  %v811 = vpop.f32.mrb[0].mxu0
  %v812 = vadd.f32 %v684, %v811
  %v813 = vpop.f32.mrb[0].mxu0
  %814 = vmatprep.mubr.f32.mxu0 0.0
  %815 = vmatmul.mubr.f32.gmra.mrb[0].mxu0 %v582
  %v816 = vpop.f32.mrb[0].mxu0
  %v817 = vadd.f32 %v689, %v816
  %v818 = vpop.f32.mrb[0].mxu0
  %819 = vmatprep.mubr.f32.mxu0 0.0
  %820 = vmatmul.mubr.f32.gmra.mrb[0].mxu0 %v585
  %v821 = vpop.f32.mrb[0].mxu0
  %v822 = vadd.f32 %v694, %v821
  %v823 = vpop.f32.mrb[0].mxu0
  %824 = vmatprep.mubr.f32.mxu0 0.0
  %825 = vmatmul.mubr.f32.gmra.mrb[0].mxu0 %v588
  %v826 = vpop.f32.mrb[0].mxu0
  %v827 = vadd.f32 %v699, %v826
  %v828 = vpop.f32.mrb[0].mxu0
  %829 = vmatprep.mubr.f32.mxu0 0.0
  %830 = vmatmul.mubr.f32.gmra.mrb[0].mxu0 %v591
  %v831 = vpop.f32.mrb[0].mxu0
  %v832 = vadd.f32 %v704, %v831
  %v833 = vpop.f32.mrb[0].mxu0
  %834 = vmatprep.mubr.f32.mxu0 0.0
  %835 = vmatmul.mubr.f32.gmra.mrb[0].mxu0 %v594
  %v836 = vpop.f32.mrb[0].mxu0
  %v837 = vadd.f32 %v709, %v836
  %v838 = vpop.f32.mrb[0].mxu0
  %839 = vmatprep.mubr.f32.mxu0 0.0
  %840 = vmatmul.mubr.f32.gmra.mrb[0].mxu0 %v597
  %v841 = vpop.f32.mrb[0].mxu0
  %v842 = vadd.f32 %v714, %v841
  %v843 = vpop.f32.mrb[0].mxu0
  %844 = vmatprep.mubr.f32.mxu0 0.0
  %845 = vmatmul.mubr.f32.gmra.mrb[0].mxu0 %v600
  %v846 = vpop.f32.mrb[0].mxu0
  %v847 = vadd.f32 %v719, %v846
  %v848 = vpop.f32.mrb[0].mxu0
  %849 = vmatprep.mubr.f32.mxu0 0.0
  %850 = vmatmul.mubr.f32.gmra.mrb[0].mxu0 %v603
  %v851 = vpop.f32.mrb[0].mxu0
  %v852 = vadd.f32 %v724, %v851
  %v853 = vpop.f32.mrb[0].mxu0
  %854 = vmatprep.mubr.f32.mxu0 0.0
  %855 = vmatmul.mubr.f32.gmra.mrb[0].mxu0 %v606
  %v856 = vpop.f32.mrb[0].mxu0
  %v857 = vadd.f32 %v729, %v856
  %v858 = vpop.f32.mrb[0].mxu0
  %859 = vmatprep.mubr.f32.mxu0 0.0
  %860 = vmatmul.mubr.f32.gmra.mrb[0].mxu0 %v609
  %v861 = vpop.f32.mrb[0].mxu0
  %v862 = vadd.f32 %v734, %v861
  %v863 = vpop.f32.mrb[0].mxu0
  %864 = vmatprep.mubr.f32.mxu0 0.0
  %865 = vmatmul.mubr.f32.gmra.mrb[0].mxu0 %v612
  %v866 = vpop.f32.mrb[0].mxu0
  %v867 = vadd.f32 %v739, %v866
  %v868 = vpop.f32.mrb[0].mxu0
  %869 = vdwg.mxu0
  %v870 = vld [vmem:[%s2 + $0x88] sm:$0xff]
  %v871 = vld [vmem:[%s2 + $0x90] sm:$0xff]
  %v873 = vsel %vm580, %v575, 0
  %875 = vmatprep.subr.mxu0 0.0
  %876 = vmatpush1.msra.mxu0 %v870
  %877 = vmatprep.subr.mxu0 0.0
  %878 = vmatpush1.msra.mxu0 %v871
  %879 = vmatprep.subr.mxu0 0.0
  %880 = vmatpush1.msra.mxu0 0.0
  %881 = vmatprep.subr.mxu0 0.0
  %882 = vmatpush1.msra.mxu0 0.0
  %883 = vmatprep.subr.mxu0 0.0
  %884 = vmatpush1.msra.mxu0 0.0
  %885 = vmatprep.subr.mxu0 0.0
  %886 = vmatpush1.msra.mxu0 0.0
  %887 = vmatprep.subr.mxu0 0.0
  %888 = vmatpush1.msra.mxu0 0.0
  %889 = vmatprep.subr.mxu0 0.0
  %890 = vmatpush1.msra.mxu0 0.0
  %891 = vmatprep.subr.mxu0 0.0
  %892 = vmatpush1.msra.mxu0 0.0
  %893 = vmatprep.subr.mxu0 0.0
  %894 = vmatpush1.msra.mxu0 0.0
  %895 = vmatprep.subr.mxu0 0.0
  %896 = vmatpush1.msra.mxu0 0.0
  %897 = vmatprep.subr.mxu0 0.0
  %898 = vmatpush1.msra.mxu0 0.0
  %899 = vmatprep.subr.mxu0 0.0
  %900 = vmatpush1.msra.mxu0 0.0
  %901 = vmatprep.subr.mxu0 0.0
  %902 = vmatpush1.msra.mxu0 0.0
  %903 = vmatprep.subr.mxu0 0.0
  %904 = vmatpush1.msra.mxu0 0.0
  %905 = vmatprep.subr.mxu0 0.0
  %906 = vmatpush1.msra.mxu0 0.0
  %907 = vmatprep.subr.mxu0 0.0
  %908 = vmatpush1.msra.mxu0 0.0
  %909 = vmatprep.subr.mxu0 0.0
  %910 = vmatpush1.msra.mxu0 0.0
  %911 = vmatprep.subr.mxu0 0.0
  %912 = vmatpush1.msra.mxu0 0.0
  %913 = vmatprep.subr.mxu0 0.0
  %914 = vmatpush1.msra.mxu0 0.0
  %915 = vmatprep.subr.mxu0 0.0
  %916 = vmatpush1.msra.mxu0 0.0
  %917 = vmatprep.subr.mxu0 0.0
  %918 = vmatpush1.msra.mxu0 0.0
  %919 = vmatprep.subr.mxu0 0.0
  %920 = vmatpush1.msra.mxu0 0.0
  %921 = vmatprep.subr.mxu0 0.0
  %922 = vmatpush1.msra.mxu0 0.0
  %923 = vmatprep.subr.mxu0 0.0
  %924 = vmatpush1.msra.mxu0 0.0
  %925 = vmatprep.subr.mxu0 0.0
  %926 = vmatpush1.msra.mxu0 0.0
  %927 = vmatprep.subr.mxu0 0.0
  %928 = vmatpush1.msra.mxu0 0.0
  %929 = vmatprep.subr.mxu0 0.0
  %930 = vmatpush1.msra.mxu0 0.0
  %931 = vmatprep.subr.mxu0 0.0
  %932 = vmatpush1.msra.mxu0 0.0
  %933 = vmatprep.subr.mxu0 0.0
  %934 = vmatpush1.msra.mxu0 0.0
  %935 = vmatprep.subr.mxu0 0.0
  %936 = vmatpush1.msra.mxu0 0.0
  %937 = vmatprep.subr.mxu0 0.0
  %938 = vmatpush1.msra.mxu0 0.0
  %939 = vmatprep.mubr.f32.mxu0 0.0
  %940 = vmatmul.mubr.f32.gmra.mrb[0].mxu0 %v585
  %v941 = vpop.f32.mrb[0].mxu0
  %v942 = vadd.f32 0.0, %v941
  %v943 = vpop.f32.mrb[0].mxu0
  %944 = vmatprep.mubr.f32.mxu0 0.0
  %945 = vmatmul.mubr.f32.gmra.mrb[0].mxu0 %v588
  %v946 = vpop.f32.mrb[0].mxu0
  %v947 = vadd.f32 0.0, %v946
  %v948 = vpop.f32.mrb[0].mxu0
  %949 = vmatprep.mubr.f32.mxu0 0.0
  %950 = vmatmul.mubr.f32.gmra.mrb[0].mxu0 %v591
  %v951 = vpop.f32.mrb[0].mxu0
  %v952 = vadd.f32 0.0, %v951
  %v953 = vpop.f32.mrb[0].mxu0
  %954 = vmatprep.mubr.f32.mxu0 0.0
  %955 = vmatmul.mubr.f32.gmra.mrb[0].mxu0 %v594
  %v956 = vpop.f32.mrb[0].mxu0
  %v957 = vadd.f32 0.0, %v956
  %v958 = vpop.f32.mrb[0].mxu0
  %959 = vmatprep.mubr.f32.mxu0 0.0
  %960 = vmatmul.mubr.f32.gmra.mrb[0].mxu0 %v597
  %v961 = vpop.f32.mrb[0].mxu0
  %v962 = vadd.f32 0.0, %v961
  %v963 = vpop.f32.mrb[0].mxu0
  %964 = vmatprep.mubr.f32.mxu0 0.0
  %965 = vmatmul.mubr.f32.gmra.mrb[0].mxu0 %v600
  %v966 = vpop.f32.mrb[0].mxu0
  %v967 = vadd.f32 0.0, %v966
  %v968 = vpop.f32.mrb[0].mxu0
  %969 = vmatprep.mubr.f32.mxu0 0.0
  %970 = vmatmul.mubr.f32.gmra.mrb[0].mxu0 %v603
  %v971 = vpop.f32.mrb[0].mxu0
  %v972 = vadd.f32 0.0, %v971
  %v973 = vpop.f32.mrb[0].mxu0
  %974 = vmatprep.mubr.f32.mxu0 0.0
  %975 = vmatmul.mubr.f32.gmra.mrb[0].mxu0 %v606
  %v976 = vpop.f32.mrb[0].mxu0
  %v977 = vadd.f32 0.0, %v976
  %v978 = vpop.f32.mrb[0].mxu0
  %979 = vmatprep.mubr.f32.mxu0 0.0
  %980 = vmatmul.mubr.f32.gmra.mrb[0].mxu0 %v609
  %v981 = vpop.f32.mrb[0].mxu0
  %v982 = vadd.f32 0.0, %v981
  %v983 = vpop.f32.mrb[0].mxu0
  %984 = vmatprep.mubr.f32.mxu0 0.0
  %985 = vmatmul.mubr.f32.gmra.mrb[0].mxu0 %v612
  %v986 = vpop.f32.mrb[0].mxu0
  %v987 = vadd.f32 0.0, %v986
  %v988 = vpop.f32.mrb[0].mxu0
  %989 = vmatprep.mubr.f32.mxu0 0.0
  %990 = vmatmul.mubr.f32.gmra.mrb[0].mxu0 %v615
  %v991 = vpop.f32.mrb[0].mxu0
  %v992 = vadd.f32 0.0, %v991
  %v993 = vpop.f32.mrb[0].mxu0
  %994 = vmatprep.mubr.f32.mxu0 0.0
  %995 = vmatmul.mubr.f32.gmra.mrb[0].mxu0 %v873
  %v996 = vpop.f32.mrb[0].mxu0
  %v997 = vadd.f32 0.0, %v996
  %v998 = vpop.f32.mrb[0].mxu0
  %999 = vdwg.mxu0
  %v1000 = vadd.f32 %v812, %v942
  %v1001 = vadd.f32 %v817, %v947
  %v1002 = vadd.f32 %v822, %v952
  %v1003 = vadd.f32 %v827, %v957
  %v1004 = vadd.f32 %v832, %v962
  %v1005 = vadd.f32 %v837, %v967
  %v1006 = vadd.f32 %v842, %v972
  %v1007 = vadd.f32 %v847, %v977
  %v1008 = vadd.f32 %v852, %v982
  %v1009 = vadd.f32 %v857, %v987
  %v1010 = vadd.f32 %v862, %v992
  %v1011 = vadd.f32 %v867, %v997
  %v1012 = vld [vmem:[%s2 + $0x98] sm:$0x1]
  %v1013 = vlaneseq
  %v1014 = vshrl.u32 %v1013, 7
  %v1015 = vsub.s32 0, %v1014
  %v1016 = vrot.slane %v1012, %v1015
  %v1017 = vadd.f32 %v1000, %v1016
  %v1018 = vadd.f32 %v1001, %v1016
  %v1019 = vadd.f32 %v1002, %v1016
  %v1020 = vadd.f32 %v1003, %v1016
  %v1021 = vadd.f32 %v1004, %v1016
  %v1022 = vadd.f32 %v1005, %v1016
  %v1023 = vadd.f32 %v1006, %v1016
  %v1024 = vadd.f32 %v1007, %v1016
  %v1025 = vadd.f32 %v1008, %v1016
  %v1026 = vadd.f32 %v1009, %v1016
  %v1027 = vadd.f32 %v1010, %v1016
  %v1028 = vadd.f32 %v1011, %v1016
  %v1029 = vld [vmem:[%s1] sm:$0xff]
  %v1030 = vmul.f32 %v1017, %v1029
  %v1031 = vmul.f32 %v1018, %v1029
  %v1032 = vmul.f32 %v1019, %v1029
  %v1033 = vmul.f32 %v1020, %v1029
  %v1034 = vmul.f32 %v1021, %v1029
  %v1035 = vmul.f32 %v1022, %v1029
  %v1036 = vmul.f32 %v1023, %v1029
  %v1037 = vmul.f32 %v1024, %v1029
  %v1038 = vmul.f32 %v1025, %v1029
  %v1039 = vmul.f32 %v1026, %v1029
  %v1040 = vmul.f32 %v1027, %v1029
  %v1041 = vmul.f32 %v1028, %v1029
  %v1042 = vmul.f32 %v1030, %v1030
  %v1043 = vmul.f32 %v1031, %v1031
  %v1044 = vmul.f32 %v1032, %v1032
  %v1045 = vmul.f32 %v1033, %v1033
  %v1046 = vmul.f32 %v1034, %v1034
  %v1047 = vmul.f32 %v1035, %v1035
  %v1048 = vmul.f32 %v1036, %v1036
  %v1049 = vmul.f32 %v1037, %v1037
  %v1050 = vmul.f32 %v1038, %v1038
  %v1051 = vmul.f32 %v1039, %v1039
  %v1052 = vmul.f32 %v1040, %v1040
  %v1053 = vmul.f32 %v1041, %v1041
  %v1054 = vsel %vm580, %v1042, 0.0
  %1055 = vadd.xlane.f32.xlu0 %v1054
  %v1056 = vpop.xlane.xlu0 %1055
  %v1057 = vsel %vm580, %v1043, 0.0
  %1058 = vadd.xlane.f32.xlu0 %v1057
  %v1059 = vpop.xlane.xlu0 %1058
  %v1060 = vsel %vm580, %v1044, 0.0
  %1061 = vadd.xlane.f32.xlu0 %v1060
  %v1062 = vpop.xlane.xlu0 %1061
  %v1063 = vsel %vm580, %v1045, 0.0
  %1064 = vadd.xlane.f32.xlu0 %v1063
  %v1065 = vpop.xlane.xlu0 %1064
  %v1066 = vsel %vm580, %v1046, 0.0
  %1067 = vadd.xlane.f32.xlu0 %v1066
  %v1068 = vpop.xlane.xlu0 %1067
  %v1069 = vsel %vm580, %v1047, 0.0
  %1070 = vadd.xlane.f32.xlu0 %v1069
  %v1071 = vpop.xlane.xlu0 %1070
  %v1072 = vsel %vm580, %v1048, 0.0
  %1073 = vadd.xlane.f32.xlu0 %v1072
  %v1074 = vpop.xlane.xlu0 %1073
  %v1075 = vsel %vm580, %v1049, 0.0
  %1076 = vadd.xlane.f32.xlu0 %v1075
  %v1077 = vpop.xlane.xlu0 %1076
  %v1078 = vsel %vm580, %v1050, 0.0
  %1079 = vadd.xlane.f32.xlu0 %v1078
  %v1080 = vpop.xlane.xlu0 %1079
  %v1081 = vsel %vm580, %v1051, 0.0
  %1082 = vadd.xlane.f32.xlu0 %v1081
  %v1083 = vpop.xlane.xlu0 %1082
  %v1084 = vsel %vm580, %v1052, 0.0
  %1085 = vadd.xlane.f32.xlu0 %v1084
  %v1086 = vpop.xlane.xlu0 %1085
  %v1087 = vsel %vm580, %v1053, 0.0
  %1088 = vadd.xlane.f32.xlu0 %v1087
  %v1089 = vpop.xlane.xlu0 %1088
  %v1090 = vmax.f32 %v1056, 1e-24
  %v1091 = vmax.f32 %v1059, 1e-24
  %v1092 = vmax.f32 %v1062, 1e-24
  %v1093 = vmax.f32 %v1065, 1e-24
  %v1094 = vmax.f32 %v1068, 1e-24
  %v1095 = vmax.f32 %v1071, 1e-24
  %v1096 = vmax.f32 %v1074, 1e-24
  %v1097 = vmax.f32 %v1077, 1e-24
  %v1098 = vmax.f32 %v1080, 1e-24
  %v1099 = vmax.f32 %v1083, 1e-24
  %v1100 = vmax.f32 %v1086, 1e-24
  %v1101 = vmax.f32 %v1089, 1e-24
  %v1102 = vrsqrt.pop %v1090
  %v1103 = vrsqrt.pop %v1091
  %v1104 = vrsqrt.pop %v1092
  %v1105 = vrsqrt.pop %v1093
  %v1106 = vrsqrt.pop %v1094
  %v1107 = vrsqrt.pop %v1095
  %v1108 = vrsqrt.pop %v1096
  %v1109 = vrsqrt.pop %v1097
  %v1110 = vrsqrt.pop %v1098
  %v1111 = vrsqrt.pop %v1099
  %v1112 = vrsqrt.pop %v1100
  %v1113 = vrsqrt.pop %v1101
  %v1114 = vmul.f32 %v1030, %v1102
  %v1115 = vmul.f32 %v1031, %v1103
  %v1116 = vmul.f32 %v1032, %v1104
  %v1117 = vmul.f32 %v1033, %v1105
  %v1118 = vmul.f32 %v1034, %v1106
  %v1119 = vmul.f32 %v1035, %v1107
  %v1120 = vmul.f32 %v1036, %v1108
  %v1121 = vmul.f32 %v1037, %v1109
  %v1122 = vmul.f32 %v1038, %v1110
  %v1123 = vmul.f32 %v1039, %v1111
  %v1124 = vmul.f32 %v1040, %v1112
  %v1125 = vmul.f32 %v1041, %v1113
  %1126 = vst.msk [vmem:[%s3] sm:$0xff] %vm580, %v1114
  %1127 = vst.msk [vmem:[%s3 + $0x8] sm:$0xff] %vm580, %v1115
  %1128 = vst.msk [vmem:[%s3 + $0x10] sm:$0xff] %vm580, %v1116
  %1129 = vst.msk [vmem:[%s3 + $0x18] sm:$0xff] %vm580, %v1117
  %1130 = vst.msk [vmem:[%s3 + $0x20] sm:$0xff] %vm580, %v1118
  %1131 = vst.msk [vmem:[%s3 + $0x28] sm:$0xff] %vm580, %v1119
  %1132 = vst.msk [vmem:[%s3 + $0x30] sm:$0xff] %vm580, %v1120
  %1133 = vst.msk [vmem:[%s3 + $0x38] sm:$0xff] %vm580, %v1121
  %1134 = vst.msk [vmem:[%s3 + $0x40] sm:$0xff] %vm580, %v1122
  %1135 = vst.msk [vmem:[%s3 + $0x48] sm:$0xff] %vm580, %v1123
  %1136 = vst.msk [vmem:[%s3 + $0x50] sm:$0xff] %vm580, %v1124
  %1137 = vst.msk [vmem:[%s3 + $0x58] sm:$0xff] %vm580, %v1125
  // Predicated region
  $region14: #{tpu_custom_call.1} parent=0 // pred_check
    _
  $region15: #{tpu_custom_call.1} parent=0 // pred_check_branch
    %1139 = sbr.rel (0) target = $region17
  $region16: #{tpu_custom_call.1} parent=0 // pred_region
    _
  $region17: #{tpu_custom_call.1} parent=0 // pred_fallthru
    _
  // Predicated region
  $region18: #{tpu_custom_call.1} parent=0 // pred_check
    _
  $region19: #{tpu_custom_call.1} parent=0 // pred_check_branch
    %1141 = sbr.rel (0) target = $region21
  $region20: #{tpu_custom_call.1} parent=0 // pred_region
    _
  $region21: #{tpu_custom_call.1} parent=0 // pred_fallthru
    _

</llo_original>
